<compile_context>
chip_gen: v6e
topology: v6e:2x2x1
jax: 0.10.0
libtpu: 0.0.40
codegen_flags: <defaults>
</compile_context>

<pallas_src>
import math

import jax
import jax.numpy as jnp
from jax.experimental import pallas as pl
from jax.experimental.pallas import tpu as pltpu

_LANES = 128
_MAX_BLOCK_ROWS = 4096   # 4096 x 128 x 4 B = 2 MiB per f32 input block
_MIN_KERNEL_ROWS = 8     # below this a kernel launch is pure overhead -> jnp


def _round_up(x, m):
    return ((x + m - 1) // m) * m


def _geometry(rows, max_block_rows):
    """Pick (num_chunks, steps_per_chunk, block_rows) for a `rows x 128` slab.

    Trace-time invariants:
      * block_rows % 8 == 0 and block_rows <= max_block_rows
      * num_chunks * steps * block_rows >= rows          (full coverage)
      * (num_chunks * steps - 1) * block_rows < rows     (no fully-OOB block)
    """
    assert rows >= _MIN_KERNEL_ROWS
    max_block_rows = max(8, (max_block_rows // 8) * 8)
    # Try a 2-chunk split (dual TensorCore on v7x; harmless on v5e/v6e).
    if rows >= 16:
        nb = _round_up(pl.cdiv(rows, max_block_rows), 2)
        block = min(max_block_rows, _round_up(pl.cdiv(rows, nb), 8))
        nb = pl.cdiv(rows, block)
        if nb % 2 == 0 and (nb - 1) * block < rows:
            return 2, nb // 2, block
    block = min(max_block_rows, (rows // 8) * 8)
    return 1, pl.cdiv(rows, block), block


# ---------------------------------------------------------------------------
# Kernels (geometry is trace-time static, captured by closure)
# ---------------------------------------------------------------------------
def _make_sum_log_kernel(block_rows, steps, num_chunks, rows):
    needs_mask = (num_chunks * steps * block_rows) != rows

    def accum(acc_ref, vals):
        # (block_rows,128) -> (block_rows//8, 8, 128) is layout-preserving;
        # the leading-axis sum is pure VPU adds into one resident vreg.
        acc_ref[...] += jnp.sum(vals.reshape(block_rows // 8, 8, _LANES),
                                axis=0)

    def kernel(x_ref, o_ref, acc_ref):
        c = pl.program_id(0)
        i = pl.program_id(1)

        @pl.when(i == 0)
        def _():
            acc_ref[...] = jnp.zeros_like(acc_ref)

        if needs_mask:
            is_tail = jnp.logical_and(c == num_chunks - 1, i == steps - 1)

            @pl.when(jnp.logical_not(is_tail))
            def _():
                accum(acc_ref, jnp.log(x_ref[...].astype(jnp.float32)))

            @pl.when(is_tail)
            def _():
                # Rows past the real data read undefined VMEM: substitute 1.0
                # BEFORE the log so they contribute exactly 0.
                lim = rows - (c * steps + i) * block_rows
                row = jax.lax.broadcasted_iota(jnp.int32,
                                               (block_rows, _LANES), 0)
                x = jnp.where(row < lim, x_ref[...].astype(jnp.float32), 1.0)
                accum(acc_ref, jnp.log(x))
        else:
            accum(acc_ref, jnp.log(x_ref[...].astype(jnp.float32)))

        @pl.when(i == steps - 1)
        def _():
            o_ref[...] = acc_ref[...]

    return kernel


def _make_sse_kernel(block_rows, steps, num_chunks, rows):
    needs_mask = (num_chunks * steps * block_rows) != rows

    def accum(acc_ref, vals):
        acc_ref[...] += jnp.sum(vals.reshape(block_rows // 8, 8, _LANES),
                                axis=0)

    def kernel(a_ref, b_ref, o_ref, acc_ref):
        c = pl.program_id(0)
        i = pl.program_id(1)

        @pl.when(i == 0)
        def _():
            acc_ref[...] = jnp.zeros_like(acc_ref)

        if needs_mask:
            is_tail = jnp.logical_and(c == num_chunks - 1, i == steps - 1)

            @pl.when(jnp.logical_not(is_tail))
            def _():
                d = a_ref[...].astype(jnp.float32) - b_ref[...].astype(jnp.float32)
                accum(acc_ref, d * d)

            @pl.when(is_tail)
            def _():
                lim = rows - (c * steps + i) * block_rows
                row = jax.lax.broadcasted_iota(jnp.int32,
                                               (block_rows, _LANES), 0)
                d = a_ref[...].astype(jnp.float32) - b_ref[...].astype(jnp.float32)
                d = jnp.where(row < lim, d, 0.0)   # mask BEFORE the square
                accum(acc_ref, d * d)
        else:
            d = a_ref[...].astype(jnp.float32) - b_ref[...].astype(jnp.float32)
            accum(acc_ref, d * d)

        @pl.when(i == steps - 1)
        def _():
            o_ref[...] = acc_ref[...]

    return kernel


# ---------------------------------------------------------------------------
# pallas_call wrapper shared by both reductions
# ---------------------------------------------------------------------------
def _reduce_pallas(kernel, inputs, rows, block_rows, steps, num_chunks,
                   flops, transcendentals):
    n = rows * _LANES
    bytes_accessed = (sum(jnp.dtype(x.dtype).itemsize for x in inputs) * n
                      + num_chunks * 8 * _LANES * 4)
    in_specs = [pl.BlockSpec((block_rows, _LANES),
                             lambda c, i: (c * steps + i, 0))
                for _ in inputs]
    out = pl.pallas_call(
        kernel,
        out_shape=jax.ShapeDtypeStruct((num_chunks * 8, _LANES), jnp.float32),
        grid_spec=pltpu.PrefetchScalarGridSpec(
            num_scalar_prefetch=0,
            grid=(num_chunks, steps),
            in_specs=in_specs,
            out_specs=pl.BlockSpec((8, _LANES), lambda c, i: (c, 0)),
            scratch_shapes=[pltpu.VMEM((8, _LANES), jnp.float32)],
        ),
        compiler_params=pltpu.CompilerParams(
            dimension_semantics=("parallel", "arbitrary")),
        cost_estimate=pl.CostEstimate(
            flops=flops, transcendentals=transcendentals,
            bytes_accessed=bytes_accessed),
    )(*inputs)
    return jnp.sum(out)   # tiny (num_chunks*8, 128) partial-sum combine


# ---------------------------------------------------------------------------
# Public reductions
# ---------------------------------------------------------------------------
def _sum_log(arrays, max_block_rows=_MAX_BLOCK_ROWS):
    """sum(log(x)) over all elements of all arrays (single fused kernel launch)."""
    flats = [jnp.reshape(a, (-1,)) for a in arrays]
    if len(flats) > 1:
        dt = jnp.result_type(*[f.dtype for f in flats])
        flat = jnp.concatenate([f.astype(dt) for f in flats])
    else:
        flat = flats[0]
    n = flat.shape[0]
    rows = n // _LANES
    total = jnp.float32(0.0)
    if rows >= _MIN_KERNEL_ROWS:
        num_chunks, steps, block_rows = _geometry(rows, max_block_rows)
        x2d = flat[: rows * _LANES].reshape(rows, _LANES)
        kernel = _make_sum_log_kernel(block_rows, steps, num_chunks, rows)
        total = total + _reduce_pallas(
            kernel, [x2d], rows, block_rows, steps, num_chunks,
            flops=rows * _LANES, transcendentals=rows * _LANES)
        tail = flat[rows * _LANES:]
    else:
        tail = flat
    if tail.shape[0]:
        total = total + jnp.sum(jnp.log(tail.astype(jnp.float32)))
    return total


def _sum_squared_error(a, b, max_block_rows=_MAX_BLOCK_ROWS):
    """sum((a-b)^2) over all elements."""
    af = jnp.reshape(a, (-1,))
    bf = jnp.reshape(b, (-1,))
    assert af.shape == bf.shape
    n = af.shape[0]
    rows = n // _LANES
    total = jnp.float32(0.0)
    if rows >= _MIN_KERNEL_ROWS:
        num_chunks, steps, block_rows = _geometry(rows, max_block_rows)
        a2d = af[: rows * _LANES].reshape(rows, _LANES)
        b2d = bf[: rows * _LANES].reshape(rows, _LANES)
        kernel = _make_sse_kernel(block_rows, steps, num_chunks, rows)
        total = total + _reduce_pallas(
            kernel, [a2d, b2d], rows, block_rows, steps, num_chunks,
            flops=3 * rows * _LANES, transcendentals=0)
        a_tail, b_tail = af[rows * _LANES:], bf[rows * _LANES:]
    else:
        a_tail, b_tail = af, bf
    if a_tail.shape[0]:
        d = a_tail.astype(jnp.float32) - b_tail.astype(jnp.float32)
        total = total + jnp.sum(d * d)
    return total


# ---------------------------------------------------------------------------
# RateDistortionLoss forward (type='mse')
# ---------------------------------------------------------------------------
def rate_distortion_loss(output, target, lmbda=0.01,
                         max_block_rows=_MAX_BLOCK_ROWS):
    """output: dict with 'x_hat' (N,C,H,W) and 'likelihoods' (dict of arrays).
    target: (N,C,H,W). Returns dict with 'bpp_loss', 'mse_loss', 'loss'."""
    N, _, H, W = target.shape
    num_pixels = N * H * W

    # bpp_loss = sum_k sum(log(likelihoods_k)) / (-log(2) * num_pixels)
    liks = list(output["likelihoods"].values())
    log_sum = _sum_log(liks, max_block_rows)
    bpp_loss = log_sum / (-math.log(2) * num_pixels)

    # mse_loss = mean((x_hat - target)^2) over ALL elements (N*C*H*W)
    x_hat = output["x_hat"]
    n_elems = 1
    for s in x_hat.shape:
        n_elems *= s
    mse_loss = _sum_squared_error(x_hat, target, max_block_rows) / jnp.float32(n_elems)

    loss = lmbda * (255.0 ** 2) * mse_loss + bpp_loss
    return {"bpp_loss": bpp_loss, "mse_loss": mse_loss, "loss": loss}


if __name__ == "__main__":
    key = jax.random.PRNGKey(0)
    k1, k2, k3, k4 = jax.random.split(key, 4)

    # Small shapes consistent with an image-compression forward pass.
    N, C, H, W = 2, 3, 32, 24
    target = jax.random.uniform(k1, (N, C, H, W), jnp.float32)       # image in [0,1)
    x_hat = jnp.clip(
        target + 0.05 * jax.random.normal(k2, (N, C, H, W), jnp.float32), 0.0, 1.0)
    # likelihoods must be in (0, 1]
    lik_y = jax.random.uniform(k3, (N, 32, H // 4, W // 4), jnp.float32,
                               minval=0.01, maxval=1.0)
    lik_z = jax.random.uniform(k4, (N, 15, H // 8, W // 8), jnp.float32,
                               minval=0.01, maxval=1.0)

    output = {"x_hat": x_hat, "likelihoods": {"y": lik_y, "z": lik_z}}

    # Default (big-block) path under jit.
    loss_fn = jax.jit(lambda o, t: rate_distortion_loss(o, t, lmbda=0.01))
    out = loss_fn(output, target)
    jax.block_until_ready(out)

    # Pure-JAX reference.
    num_pixels = N * H * W
    ref_bpp = (jnp.sum(jnp.log(lik_y)) + jnp.sum(jnp.log(lik_z))) / (
        -math.log(2) * num_pixels)
    ref_mse = jnp.mean((x_hat - target) ** 2)
    ref_loss = 0.01 * 255.0 ** 2 * ref_mse + ref_bpp

    assert jnp.allclose(out["bpp_loss"], ref_bpp, rtol=1e-4, atol=1e-4)
    assert jnp.allclose(out["mse_loss"], ref_mse, rtol=1e-4, atol=1e-6)
    assert jnp.allclose(out["loss"], ref_loss, rtol=1e-4, atol=1e-4)

    # Extra coverage: small blocks exercise multi-step accumulation, the
    # 2-chunk split, and the masked tail block.
    out_small = rate_distortion_loss(output, target, lmbda=0.01, max_block_rows=8)
    jax.block_until_ready(out_small)
    assert jnp.allclose(out_small["bpp_loss"], ref_bpp, rtol=1e-4, atol=1e-4)
    assert jnp.allclose(out_small["mse_loss"], ref_mse, rtol=1e-4, atol=1e-6)
    assert jnp.allclose(out_small["loss"], ref_loss, rtol=1e-4, atol=1e-4)

    print("KERNEL_OK")
</pallas_src>

<mosaic_0001>
module attributes {stable_mosaic.version = 11 : i64} {
  func.func @kernel(%arg0: i32, %arg1: i32, %arg2: memref<16x128xf32, #tpu.memory_space<vmem>>, %arg3: memref<8x128xf32, #tpu.memory_space<vmem>>, %arg4: memref<8x128xf32, #tpu.memory_space<vmem>>) attributes {dimension_semantics = [#tpu.dimension_semantics<parallel>, #tpu.dimension_semantics<arbitrary>], iteration_bounds = array<i64: 2, 1>, scalar_prefetch = 0 : i64, scratch_operands = 1 : i64, tpu.core_type = #tpu.core_type<tc>, window_params = [{transform_indices = @transform_0, window_bounds = array<i64: 16, 128>}, {transform_indices = @transform_1, window_bounds = array<i64: 8, 128>}]} {
    %c0_i32 = arith.constant 0 : i32
    %0 = arith.cmpi eq, %arg1, %c0_i32 : i32
    %1 = arith.extui %0 : i1 to i32
    %c0_i32_0 = arith.constant 0 : i32
    %2 = arith.cmpi ne, %1, %c0_i32_0 : i32
    scf.if %2 {
      %cst = arith.constant 0.000000e+00 : f32
      %14 = vector.broadcast %cst : f32 to vector<8x128xf32>
      %c0 = arith.constant 0 : index
      %c0_6 = arith.constant 0 : index
      %15 = vector.load %arg4[%c0, %c0_6] : memref<8x128xf32, #tpu.memory_space<vmem>>, vector<8x128xf32>
      tpu.vector_store %arg4[%c0, %c0_6], %14 {strides = array<i32>} : memref<8x128xf32, #tpu.memory_space<vmem>>, vector<8x128xf32>,
    } else {
    }
    %c1_i32 = arith.constant 1 : i32
    %3 = arith.cmpi eq, %arg0, %c1_i32 : i32
    %c0_i32_1 = arith.constant 0 : i32
    %4 = arith.cmpi eq, %arg1, %c0_i32_1 : i32
    %5 = arith.andi %3, %4 : i1
    %true = arith.constant true
    %6 = arith.xori %5, %true : i1
    %7 = arith.extui %6 : i1 to i32
    %c0_i32_2 = arith.constant 0 : i32
    %8 = arith.cmpi ne, %7, %c0_i32_2 : i32
    scf.if %8 {
      %c0 = arith.constant 0 : index
      %c0_6 = arith.constant 0 : index
      %14 = vector.load %arg2[%c0, %c0_6] : memref<16x128xf32, #tpu.memory_space<vmem>>, vector<16x128xf32>
      %15 = math.log %14 : vector<16x128xf32>
      %c0_7 = arith.constant 0 : index
      %c0_8 = arith.constant 0 : index
      %16 = vector.load %arg4[%c0_7, %c0_8] : memref<8x128xf32, #tpu.memory_space<vmem>>, vector<8x128xf32>
      %17 = vector.shape_cast %15 : vector<16x128xf32> to vector<2x8x128xf32>
      %cst = arith.constant dense<0.000000e+00> : vector<8x128xf32>
      %18 = vector.multi_reduction <add>, %17, %cst [0] : vector<2x8x128xf32> to vector<8x128xf32>
      %19 = arith.addf %16, %18 : vector<8x128xf32>
      %c0_9 = arith.constant 0 : index
      %c0_10 = arith.constant 0 : index
      %20 = vector.load %arg4[%c0_9, %c0_10] : memref<8x128xf32, #tpu.memory_space<vmem>>, vector<8x128xf32>
      tpu.vector_store %arg4[%c0_9, %c0_10], %19 {strides = array<i32>} : memref<8x128xf32, #tpu.memory_space<vmem>>, vector<8x128xf32>,
    } else {
    }
    %9 = arith.extui %5 : i1 to i32
    %c0_i32_3 = arith.constant 0 : i32
    %10 = arith.cmpi ne, %9, %c0_i32_3 : i32
    scf.if %10 {
      %c1_i32_6 = arith.constant 1 : i32
      %14 = arith.muli %arg0, %c1_i32_6 : i32
      %15 = arith.addi %14, %arg1 : i32
      %c16_i32 = arith.constant 16 : i32
      %16 = arith.muli %15, %c16_i32 : i32
      %c26_i32 = arith.constant 26 : i32
      %17 = arith.subi %c26_i32, %16 : i32
      %18 = tpu.iota {dimensions = array<i32: 0>} : vector<16x128xi32>
      %19 = vector.broadcast %17 : i32 to vector<16x128xi32>
      %20 = arith.cmpi slt, %18, %19 : vector<16x128xi32>
      %c0 = arith.constant 0 : index
      %c0_7 = arith.constant 0 : index
      %21 = vector.load %arg2[%c0, %c0_7] : memref<16x128xf32, #tpu.memory_space<vmem>>, vector<16x128xf32>
      %cst = arith.constant 1.000000e+00 : f32
      %22 = vector.broadcast %cst : f32 to vector<16x128xf32>
      %23 = arith.select %20, %21, %22 : vector<16x128xi1>, vector<16x128xf32>
      %24 = math.log %23 : vector<16x128xf32>
      %c0_8 = arith.constant 0 : index
      %c0_9 = arith.constant 0 : index
      %25 = vector.load %arg4[%c0_8, %c0_9] : memref<8x128xf32, #tpu.memory_space<vmem>>, vector<8x128xf32>
      %26 = vector.shape_cast %24 : vector<16x128xf32> to vector<2x8x128xf32>
      %cst_10 = arith.constant dense<0.000000e+00> : vector<8x128xf32>
      %27 = vector.multi_reduction <add>, %26, %cst_10 [0] : vector<2x8x128xf32> to vector<8x128xf32>
      %28 = arith.addf %25, %27 : vector<8x128xf32>
      %c0_11 = arith.constant 0 : index
      %c0_12 = arith.constant 0 : index
      %29 = vector.load %arg4[%c0_11, %c0_12] : memref<8x128xf32, #tpu.memory_space<vmem>>, vector<8x128xf32>
      tpu.vector_store %arg4[%c0_11, %c0_12], %28 {strides = array<i32>} : memref<8x128xf32, #tpu.memory_space<vmem>>, vector<8x128xf32>,
    } else {
    }
    %c0_i32_4 = arith.constant 0 : i32
    %11 = arith.cmpi eq, %arg1, %c0_i32_4 : i32
    %12 = arith.extui %11 : i1 to i32
    %c0_i32_5 = arith.constant 0 : i32
    %13 = arith.cmpi ne, %12, %c0_i32_5 : i32
    scf.if %13 {
      %c0 = arith.constant 0 : index
      %c0_6 = arith.constant 0 : index
      %14 = vector.load %arg4[%c0, %c0_6] : memref<8x128xf32, #tpu.memory_space<vmem>>, vector<8x128xf32>
      %c0_7 = arith.constant 0 : index
      %c0_8 = arith.constant 0 : index
      %15 = vector.load %arg3[%c0_7, %c0_8] : memref<8x128xf32, #tpu.memory_space<vmem>>, vector<8x128xf32>
      tpu.vector_store %arg3[%c0_7, %c0_8], %14 {strides = array<i32>} : memref<8x128xf32, #tpu.memory_space<vmem>>, vector<8x128xf32>,
    } else {
    }
    return
  }
  func.func @transform_0(%arg0: i32, %arg1: i32) -> (i32, i32) {
    %c1_i32 = arith.constant 1 : i32
    %0 = arith.muli %arg0, %c1_i32 : i32
    %1 = arith.addi %0, %arg1 : i32
    %c0_i32 = arith.constant 0 : i32
    %c0_i32_0 = arith.constant 0 : i32
    return %1, %c0_i32 : i32, i32
  }
  func.func @transform_1(%arg0: i32, %arg1: i32) -> (i32, i32) {
    %c0_i32 = arith.constant 0 : i32
    %c0_i32_0 = arith.constant 0 : i32
    return %arg0, %c0_i32 : i32, i32
  }
}

module attributes {stable_mosaic.version = 11 : i64} {
  func.func @kernel(%arg0: i32, %arg1: i32, %arg2: memref<24x128xf32, #tpu.memory_space<vmem>>, %arg3: memref<24x128xf32, #tpu.memory_space<vmem>>, %arg4: memref<8x128xf32, #tpu.memory_space<vmem>>, %arg5: memref<8x128xf32, #tpu.memory_space<vmem>>) attributes {dimension_semantics = [#tpu.dimension_semantics<parallel>, #tpu.dimension_semantics<arbitrary>], iteration_bounds = array<i64: 2, 1>, scalar_prefetch = 0 : i64, scratch_operands = 1 : i64, tpu.core_type = #tpu.core_type<tc>, window_params = [{transform_indices = @transform_0, window_bounds = array<i64: 24, 128>}, {transform_indices = @transform_1, window_bounds = array<i64: 24, 128>}, {transform_indices = @transform_2, window_bounds = array<i64: 8, 128>}]} {
    %c0_i32 = arith.constant 0 : i32
    %0 = arith.cmpi eq, %arg1, %c0_i32 : i32
    %1 = arith.extui %0 : i1 to i32
    %c0_i32_0 = arith.constant 0 : i32
    %2 = arith.cmpi ne, %1, %c0_i32_0 : i32
    scf.if %2 {
      %cst = arith.constant 0.000000e+00 : f32
      %14 = vector.broadcast %cst : f32 to vector<8x128xf32>
      %c0 = arith.constant 0 : index
      %c0_6 = arith.constant 0 : index
      %15 = vector.load %arg5[%c0, %c0_6] : memref<8x128xf32, #tpu.memory_space<vmem>>, vector<8x128xf32>
      tpu.vector_store %arg5[%c0, %c0_6], %14 {strides = array<i32>} : memref<8x128xf32, #tpu.memory_space<vmem>>, vector<8x128xf32>,
    } else {
    }
    %c1_i32 = arith.constant 1 : i32
    %3 = arith.cmpi eq, %arg0, %c1_i32 : i32
    %c0_i32_1 = arith.constant 0 : i32
    %4 = arith.cmpi eq, %arg1, %c0_i32_1 : i32
    %5 = arith.andi %3, %4 : i1
    %true = arith.constant true
    %6 = arith.xori %5, %true : i1
    %7 = arith.extui %6 : i1 to i32
    %c0_i32_2 = arith.constant 0 : i32
    %8 = arith.cmpi ne, %7, %c0_i32_2 : i32
    scf.if %8 {
      %c0 = arith.constant 0 : index
      %c0_6 = arith.constant 0 : index
      %14 = vector.load %arg2[%c0, %c0_6] : memref<24x128xf32, #tpu.memory_space<vmem>>, vector<24x128xf32>
      %c0_7 = arith.constant 0 : index
      %c0_8 = arith.constant 0 : index
      %15 = vector.load %arg3[%c0_7, %c0_8] : memref<24x128xf32, #tpu.memory_space<vmem>>, vector<24x128xf32>
      %16 = arith.subf %14, %15 : vector<24x128xf32>
      %17 = arith.mulf %16, %16 : vector<24x128xf32>
      %c0_9 = arith.constant 0 : index
      %c0_10 = arith.constant 0 : index
      %18 = vector.load %arg5[%c0_9, %c0_10] : memref<8x128xf32, #tpu.memory_space<vmem>>, vector<8x128xf32>
      %19 = vector.shape_cast %17 : vector<24x128xf32> to vector<3x8x128xf32>
      %cst = arith.constant dense<0.000000e+00> : vector<8x128xf32>
      %20 = vector.multi_reduction <add>, %19, %cst [0] : vector<3x8x128xf32> to vector<8x128xf32>
      %21 = arith.addf %18, %20 : vector<8x128xf32>
      %c0_11 = arith.constant 0 : index
      %c0_12 = arith.constant 0 : index
      %22 = vector.load %arg5[%c0_11, %c0_12] : memref<8x128xf32, #tpu.memory_space<vmem>>, vector<8x128xf32>
      tpu.vector_store %arg5[%c0_11, %c0_12], %21 {strides = array<i32>} : memref<8x128xf32, #tpu.memory_space<vmem>>, vector<8x128xf32>,
    } else {
    }
    %9 = arith.extui %5 : i1 to i32
    %c0_i32_3 = arith.constant 0 : i32
    %10 = arith.cmpi ne, %9, %c0_i32_3 : i32
    scf.if %10 {
      %c1_i32_6 = arith.constant 1 : i32
      %14 = arith.muli %arg0, %c1_i32_6 : i32
      %15 = arith.addi %14, %arg1 : i32
      %c24_i32 = arith.constant 24 : i32
      %16 = arith.muli %15, %c24_i32 : i32
      %c36_i32 = arith.constant 36 : i32
      %17 = arith.subi %c36_i32, %16 : i32
      %18 = tpu.iota {dimensions = array<i32: 0>} : vector<24x128xi32>
      %c0 = arith.constant 0 : index
      %c0_7 = arith.constant 0 : index
      %19 = vector.load %arg2[%c0, %c0_7] : memref<24x128xf32, #tpu.memory_space<vmem>>, vector<24x128xf32>
      %c0_8 = arith.constant 0 : index
      %c0_9 = arith.constant 0 : index
      %20 = vector.load %arg3[%c0_8, %c0_9] : memref<24x128xf32, #tpu.memory_space<vmem>>, vector<24x128xf32>
      %21 = arith.subf %19, %20 : vector<24x128xf32>
      %22 = vector.broadcast %17 : i32 to vector<24x128xi32>
      %23 = arith.cmpi slt, %18, %22 : vector<24x128xi32>
      %cst = arith.constant 0.000000e+00 : f32
      %24 = vector.broadcast %cst : f32 to vector<24x128xf32>
      %25 = arith.select %23, %21, %24 : vector<24x128xi1>, vector<24x128xf32>
      %26 = arith.mulf %25, %25 : vector<24x128xf32>
      %c0_10 = arith.constant 0 : index
      %c0_11 = arith.constant 0 : index
      %27 = vector.load %arg5[%c0_10, %c0_11] : memref<8x128xf32, #tpu.memory_space<vmem>>, vector<8x128xf32>
      %28 = vector.shape_cast %26 : vector<24x128xf32> to vector<3x8x128xf32>
      %cst_12 = arith.constant dense<0.000000e+00> : vector<8x128xf32>
      %29 = vector.multi_reduction <add>, %28, %cst_12 [0] : vector<3x8x128xf32> to vector<8x128xf32>
      %30 = arith.addf %27, %29 : vector<8x128xf32>
      %c0_13 = arith.constant 0 : index
      %c0_14 = arith.constant 0 : index
      %31 = vector.load %arg5[%c0_13, %c0_14] : memref<8x128xf32, #tpu.memory_space<vmem>>, vector<8x128xf32>
      tpu.vector_store %arg5[%c0_13, %c0_14], %30 {strides = array<i32>} : memref<8x128xf32, #tpu.memory_space<vmem>>, vector<8x128xf32>,
    } else {
    }
    %c0_i32_4 = arith.constant 0 : i32
    %11 = arith.cmpi eq, %arg1, %c0_i32_4 : i32
    %12 = arith.extui %11 : i1 to i32
    %c0_i32_5 = arith.constant 0 : i32
    %13 = arith.cmpi ne, %12, %c0_i32_5 : i32
    scf.if %13 {
      %c0 = arith.constant 0 : index
      %c0_6 = arith.constant 0 : index
      %14 = vector.load %arg5[%c0, %c0_6] : memref<8x128xf32, #tpu.memory_space<vmem>>, vector<8x128xf32>
      %c0_7 = arith.constant 0 : index
      %c0_8 = arith.constant 0 : index
      %15 = vector.load %arg4[%c0_7, %c0_8] : memref<8x128xf32, #tpu.memory_space<vmem>>, vector<8x128xf32>
      tpu.vector_store %arg4[%c0_7, %c0_8], %14 {strides = array<i32>} : memref<8x128xf32, #tpu.memory_space<vmem>>, vector<8x128xf32>,
    } else {
    }
    return
  }
  func.func @transform_0(%arg0: i32, %arg1: i32) -> (i32, i32) {
    %c1_i32 = arith.constant 1 : i32
    %0 = arith.muli %arg0, %c1_i32 : i32
    %1 = arith.addi %0, %arg1 : i32
    %c0_i32 = arith.constant 0 : i32
    %c0_i32_0 = arith.constant 0 : i32
    return %1, %c0_i32 : i32, i32
  }
  func.func @transform_1(%arg0: i32, %arg1: i32) -> (i32, i32) {
    %c1_i32 = arith.constant 1 : i32
    %0 = arith.muli %arg0, %c1_i32 : i32
    %1 = arith.addi %0, %arg1 : i32
    %c0_i32 = arith.constant 0 : i32
    %c0_i32_0 = arith.constant 0 : i32
    return %1, %c0_i32 : i32, i32
  }
  func.func @transform_2(%arg0: i32, %arg1: i32) -> (i32, i32) {
    %c0_i32 = arith.constant 0 : i32
    %c0_i32_0 = arith.constant 0 : i32
    return %arg0, %c0_i32 : i32, i32
  }
}

</mosaic_0001>

<llo_original>
// kernel: _lambda_.2
$region0: #{_lambda_.2}
  #allocation0 [shape = 'u32[]', space=smem, size = 0x4, offset = 0x4, fixed_abs, tag = 'smem constant byte address 0x4 - core index']
  #allocation1 [shape = 'u32[144,128]{1,0:T(1,128)}', space=vmem, size = 0x12000, scoped, tag = 'internal scratch']
  #allocation2 [shape = 'f32[8,128]{1,0:T(8,128)}', space=vmem, size = 0x1000, scoped, tag = 'scratch operand']
  %s0 = inlined_call_operand.vmem [shape: f32[26,128], index: 0, kind: input, shape index: {}]
  %s1 = inlined_call_operand.vmem [shape: f32[16,128], index: 1, kind: output, shape index: {}]
  %s2 = sld [smem:[#allocation0]]
  $region53: #{_lambda_.2} parent=0
    _
  %s4 = ssub.s32 1, %s2
  %s5 = scalar_select 0, %s4, %s2
  loop: start=0, step=1, limit=4
  $region2: #{_lambda_.2} parent=0 // loop_pre_header
    _
  $region3: #{_lambda_.2} parent=0 // loop_header
    %s7 = sphi 0, %s11
    %p8 = scmp.ge.s32.totalorder %s7, 4
    %s14 = sphi 0, %s26
    %s15 = sphi 0, %s22
    %s16 = sphi 0, %s14
    %s17 = sphi 0, %s15
    %s18 = sphi 0, %s16
    %s19 = sphi 0, %s17
    %s31 = sphi 0, %s33
    %s34 = sphi 0, %s31
    %s35 = sphi 0, %s34
    %s51 = sphi 0, %s35
    %s57 = sphi 0, %s59
    %s60 = sphi 0, %s57
    %s61 = sphi 0, %s60
    %s77 = sphi 0, %s61
  $region4: #{_lambda_.2} parent=0 // loop_header_branch
    %10 = sbr.rel (%p8) target = $region8
  $region5: #{_lambda_.2} parent=0 // loop_body
    %s12 = ssub.s32 %s7, 1
    %s13 = ssub.s32 %s7, 2
    %s20 = sadd.s32 1, %s15
    %p21 = scmp.ge.s32.totalorder %s20, 1
    %s22 = scalar_select %p21, 0, %s20
    %s23 = sadd.s32 1, %s14
    %s24 = scalar_select %p21, %s23, %s14
    %p25 = scmp.ge.s32.totalorder %s24, 2
    %s26 = scalar_select %p25, 0, %s24
    %s27 = sadd.s32 %s14, %s15
    %s28 = sadd.s32 %s26, %s22
    %s29 = ssub.s32 %s27, %s28
    %p30 = scmp.eq.s32.totalorder %s29, 0
    %s32 = sadd.s32 %s31, 1
    %s33 = scalar_select %p30, %s31, %s32
    %p36 = pneg %p30
    %p37 = scmp.eq.s32.totalorder %s7, 1
    %p38 = por %p36, %p37
    %p39 = scmp.ne.s32.totalorder %s31, %s34
    %p40 = scmp.eq.s32.totalorder %s7, 0
    %p41 = por %p39, %p40
    %p42 = scmp.ne.s32.totalorder %s31, %s34
    %p43 = scmp.eq.s32.totalorder %s12, 1
    %p44 = por %p42, %p43
    %p45 = scmp.ne.s32.totalorder %s34, %s35
    %p46 = scmp.eq.s32.totalorder %s12, 0
    %p47 = por %p45, %p46
    %p48 = scmp.ne.s32.totalorder %s34, %s35
    %p49 = scmp.eq.s32.totalorder %s13, 1
    %p50 = por %p48, %p49
    %p52 = scmp.ne.s32.totalorder %s35, %s51
    %p53 = scmp.eq.s32.totalorder %s13, 0
    %p54 = por %p52, %p53
    %s55 = ssub.s32 %s14, %s26
    %p56 = scmp.eq.s32.totalorder %s55, 0
    %s58 = sadd.s32 %s57, 1
    %s59 = scalar_select %p56, %s57, %s58
    %p62 = pneg %p56
    %p63 = scmp.eq.s32.totalorder %s7, 1
    %p64 = por %p62, %p63
    %p65 = scmp.ne.s32.totalorder %s57, %s60
    %p66 = scmp.eq.s32.totalorder %s7, 0
    %p67 = por %p65, %p66
    %p68 = scmp.ne.s32.totalorder %s57, %s60
    %p69 = scmp.eq.s32.totalorder %s12, 1
    %p70 = por %p68, %p69
    %p71 = scmp.ne.s32.totalorder %s60, %s61
    %p72 = scmp.eq.s32.totalorder %s12, 0
    %p73 = por %p71, %p72
    %p74 = scmp.ne.s32.totalorder %s60, %s61
    %p75 = scmp.eq.s32.totalorder %s13, 1
    %p76 = por %p74, %p75
    %p78 = scmp.ne.s32.totalorder %s61, %s77
    %p79 = scmp.eq.s32.totalorder %s13, 0
    %p80 = por %p78, %p79
    %p81 = scmp.le.s32.totalorder 1, %s7
    %p82 = scmp.lt.s32.totalorder %s7, 3
    %p83 = pnand %p81, %p82
    %p84 = pneg %p83
    // Predicated region
    $region9: #{_lambda_.2} parent=5 // pred_check
      _
    $region10: #{_lambda_.2} parent=5 // pred_check_branch
      %86 = sbr.rel (%p83) target = $region12
    $region11: #{_lambda_.2} parent=5 // pred_region
      %s87 = ssub.s32 %s7, 1
    $region12: #{_lambda_.2} parent=5 // pred_fallthru
      _
    %p88 = scmp.lt.s32.totalorder %s7, 2
    // Predicated region
    $region13: #{_lambda_.2} parent=5 // pred_check
      %p89 = pneg %p88
    $region14: #{_lambda_.2} parent=5 // pred_check_branch
      %91 = sbr.rel (%p89) target = $region16
    $region15: #{_lambda_.2} parent=5 // pred_region
      // Predicated region
      $region17: #{_lambda_.2} parent=15 // pred_check
        %p92 = pneg %p41
      $region18: #{_lambda_.2} parent=15 // pred_check_branch
        %94 = sbr.rel (%p92) target = $region20
      $region19: #{_lambda_.2} parent=15 // pred_region
        %s95 = sadd.s32 %s14, %s15
        %s96 = smul.u32 2, %s95
        %p97 = scmp.lt.s32.totalorder %s96, 3
        %s98 = scalar_select %p97, %s96, 3
        %s99 = smul.addr %s98, 8
        %s100 = scalar_lea.vmem %s0, %s99
        %s101 = sadd.s32 %s14, %s15
        %s102 = smul.u32 2, %s101
      $region20: #{_lambda_.2} parent=15 // pred_fallthru
        _
    $region16: #{_lambda_.2} parent=5 // pred_fallthru
      _
    %p103 = scmp.le.s32.totalorder 1, %s7
    %p104 = scmp.lt.s32.totalorder %s7, 3
    %p105 = pnand %p103, %p104
    %p106 = pneg %p105
    // Predicated region
    $region21: #{_lambda_.2} parent=5 // pred_check
      _
    $region22: #{_lambda_.2} parent=5 // pred_check_branch
      %108 = sbr.rel (%p105) target = $region24
    $region23: #{_lambda_.2} parent=5 // pred_region
      %s109 = ssub.s32 %s7, 1
      %s110 = sadd.s32 %s16, %s17
      %s111 = smul.u32 2, %s110
      %p112 = scmp.lt.s32.totalorder %s111, 3
      %s113 = scalar_select %p112, %s111, 3
      %s114 = smul.addr %s113, 8
      %s115 = scalar_lea.vmem %s0, %s114
      %p116 = pneg %p47
      %p117 = pneg %p44
      %p118 = pneg %p73
      %p119 = pneg %p70
      %p120 = scmp.lt.s32.totalorder %s16, 1
      %s121 = scalar_select %p120, %s16, 1
      %s122 = smul.addr %s121, 8
      %s123 = scalar_lea.vmem %s1, %s122
      %s124 = sadd.s32 %s16, %s17
      %s125 = smul.u32 2, %s124
      %p126 = scmp.lt.s32.totalorder %s125, 3
      %s127 = scalar_select %p126, %s125, 3
      %s128 = smul.addr %s127, 8
      %s129 = scalar_lea.vmem %s0, %s128
      %s130 = sadd.s32 %s16, %s17
      %s131 = smul.u32 2, %s130
      %p132 = scmp.lt.s32.totalorder %s16, 1
      %s133 = scalar_select %p132, %s16, 1
      %s134 = smul.addr %s133, 8
      %s135 = scalar_lea.vmem %s1, %s134
      %p136 = scmp.eq.s32.totalorder %s17, 0
      // Predicated region
      $region25: #{_lambda_.2} parent=23 // pred_check
        %p137 = pneg %p136
      $region26: #{_lambda_.2} parent=23 // pred_check_branch
        %139 = sbr.rel (%p137) target = $region28
      $region27: #{_lambda_.2} parent=23 // pred_region
        %140 = vst [vmem:[#allocation2] sm:$0xff] 0.0
      $region28: #{_lambda_.2} parent=23 // pred_fallthru
        _
      %p141 = scmp.eq.s32.totalorder %s16, 1
      %p142 = pnand %p141, %p136
      %p143 = pneg %p142
      // Predicated region
      $region29: #{_lambda_.2} parent=23 // pred_check
        _
      $region30: #{_lambda_.2} parent=23 // pred_check_branch
        %145 = sbr.rel (%p142) target = $region32
      $region31: #{_lambda_.2} parent=23 // pred_region
        %s146 = sadd.s32 %s16, %s17
        %s147 = smul.u32 %s146, 16
        %s148 = ssub.s32 26, %s147
        %v149 = vlaneseq
        %v150 = vshrl.u32 %v149, 7
        %v151 = vadd.s32 %v150, 8
        %v152 = vstv %s148
        %vm153 = vcmp.lt.s32.totalorder %v150, %v152
        %vm154 = vcmp.lt.s32.totalorder %v151, %v152
        %v155 = vld [vmem:[%s129] sm:$0xff]
        %v156 = vld [vmem:[%s129 + $0x8] sm:$0xff]
        %v157 = vsel %vm153, %v155, 1.0
        %v158 = vsel %vm154, %v156, 1.0
        %v159 = vlog2.pop %v157
        %v160 = vmul.f32 %v159, 0.6931472
        %v161 = vlog2.pop %v158
        %v162 = vmul.f32 %v161, 0.6931472
        %v163 = vld [vmem:[#allocation2] sm:$0xff]
        %v164 = vadd.f32 %v160, %v162
        %v165 = vadd.f32 %v163, %v164
        %166 = vst [vmem:[#allocation2] sm:$0xff] %v165
      $region32: #{_lambda_.2} parent=23 // pred_fallthru
        _
      // Predicated region
      $region33: #{_lambda_.2} parent=23 // pred_check
        %p167 = pneg %p142
      $region34: #{_lambda_.2} parent=23 // pred_check_branch
        %169 = sbr.rel (%p167) target = $region36
      $region35: #{_lambda_.2} parent=23 // pred_region
        %v170 = vld [vmem:[%s129] sm:$0xff]
        %v171 = vld [vmem:[%s129 + $0x8] sm:$0xff]
        %v172 = vlog2.pop %v170
        %v173 = vmul.f32 %v172, 0.6931472
        %v174 = vlog2.pop %v171
        %v175 = vmul.f32 %v174, 0.6931472
        %v176 = vld [vmem:[#allocation2] sm:$0xff]
        %v177 = vadd.f32 %v173, %v175
        %v178 = vadd.f32 %v176, %v177
        %179 = vst [vmem:[#allocation2] sm:$0xff] %v178
      $region36: #{_lambda_.2} parent=23 // pred_fallthru
        _
      // Predicated region
      $region37: #{_lambda_.2} parent=23 // pred_check
        %p180 = pneg %p136
      $region38: #{_lambda_.2} parent=23 // pred_check_branch
        %182 = sbr.rel (%p180) target = $region40
      $region39: #{_lambda_.2} parent=23 // pred_region
        %v183 = vld [vmem:[#allocation2] sm:$0xff]
        %184 = vst [vmem:[%s135] sm:$0xff] %v183
      $region40: #{_lambda_.2} parent=23 // pred_fallthru
        _
      %p185 = scmp.lt.s32.totalorder %s16, 1
      %s186 = scalar_select %p185, %s16, 1
      %s187 = smul.addr %s186, 8
      %s188 = scalar_lea.vmem %s1, %s187
      // Predicated region
      $region41: #{_lambda_.2} parent=23 // pred_check
        %p189 = pneg %p70
      $region42: #{_lambda_.2} parent=23 // pred_check_branch
        %191 = sbr.rel (%p189) target = $region44
      $region43: #{_lambda_.2} parent=23 // pred_region
        _
      $region44: #{_lambda_.2} parent=23 // pred_fallthru
        _
    $region24: #{_lambda_.2} parent=5 // pred_fallthru
      _
    %p192 = scmp.le.s32.totalorder 2, %s7
    // Predicated region
    $region45: #{_lambda_.2} parent=5 // pred_check
      %p193 = pneg %p192
    $region46: #{_lambda_.2} parent=5 // pred_check_branch
      %195 = sbr.rel (%p193) target = $region48
    $region47: #{_lambda_.2} parent=5 // pred_region
      %s196 = ssub.s32 %s7, 2
      // Predicated region
      $region49: #{_lambda_.2} parent=47 // pred_check
        %p197 = pneg %p76
      $region50: #{_lambda_.2} parent=47 // pred_check_branch
        %199 = sbr.rel (%p197) target = $region52
      $region51: #{_lambda_.2} parent=47 // pred_region
        %p200 = scmp.lt.s32.totalorder %s18, 1
        %s201 = scalar_select %p200, %s18, 1
        %s202 = smul.addr %s201, 8
        %s203 = scalar_lea.vmem %s1, %s202
      $region52: #{_lambda_.2} parent=47 // pred_fallthru
        _
    $region48: #{_lambda_.2} parent=5 // pred_fallthru
      _
  $region6: #{_lambda_.2} parent=0 // loop_footer
    %s11 = sadd.s32 1, %s7
  $region7: #{_lambda_.2} parent=0 // loop_footer_branch
    %6 = sbr.rel target = $region3
  $region8: #{_lambda_.2} parent=0 // loop_exit
    _

// kernel: _lambda_.3
$region0: #{_lambda_.3}
  #allocation0 [shape = 'u32[]', space=smem, size = 0x4, offset = 0x4, fixed_abs, tag = 'smem constant byte address 0x4 - core index']
  #allocation1 [shape = 'u32[144,128]{1,0:T(1,128)}', space=vmem, size = 0x12000, scoped, tag = 'internal scratch']
  #allocation2 [shape = 'f32[8,128]{1,0:T(8,128)}', space=vmem, size = 0x1000, scoped, tag = 'scratch operand']
  %s0 = inlined_call_operand.vmem [shape: f32[36,128], index: 0, kind: input, shape index: {}]
  %s1 = inlined_call_operand.vmem [shape: f32[36,128], index: 1, kind: input, shape index: {}]
  %s2 = inlined_call_operand.vmem [shape: f32[16,128], index: 2, kind: output, shape index: {}]
  %s3 = sld [smem:[#allocation0]]
  $region57: #{_lambda_.3} parent=0
    _
  %s5 = ssub.s32 1, %s3
  %s6 = scalar_select 0, %s5, %s3
  loop: start=0, step=1, limit=4
  $region2: #{_lambda_.3} parent=0 // loop_pre_header
    _
  $region3: #{_lambda_.3} parent=0 // loop_header
    %s8 = sphi 0, %s12
    %p9 = scmp.ge.s32.totalorder %s8, 4
    %s15 = sphi 0, %s27
    %s16 = sphi 0, %s23
    %s17 = sphi 0, %s15
    %s18 = sphi 0, %s16
    %s19 = sphi 0, %s17
    %s20 = sphi 0, %s18
    %s32 = sphi 0, %s34
    %s35 = sphi 0, %s32
    %s36 = sphi 0, %s35
    %s52 = sphi 0, %s36
    %s60 = sphi 0, %s62
    %s63 = sphi 0, %s60
    %s64 = sphi 0, %s63
    %s80 = sphi 0, %s64
    %s86 = sphi 0, %s88
    %s89 = sphi 0, %s86
    %s90 = sphi 0, %s89
    %s106 = sphi 0, %s90
  $region4: #{_lambda_.3} parent=0 // loop_header_branch
    %11 = sbr.rel (%p9) target = $region8
  $region5: #{_lambda_.3} parent=0 // loop_body
    %s13 = ssub.s32 %s8, 1
    %s14 = ssub.s32 %s8, 2
    %s21 = sadd.s32 1, %s16
    %p22 = scmp.ge.s32.totalorder %s21, 1
    %s23 = scalar_select %p22, 0, %s21
    %s24 = sadd.s32 1, %s15
    %s25 = scalar_select %p22, %s24, %s15
    %p26 = scmp.ge.s32.totalorder %s25, 2
    %s27 = scalar_select %p26, 0, %s25
    %s28 = sadd.s32 %s15, %s16
    %s29 = sadd.s32 %s27, %s23
    %s30 = ssub.s32 %s28, %s29
    %p31 = scmp.eq.s32.totalorder %s30, 0
    %s33 = sadd.s32 %s32, 1
    %s34 = scalar_select %p31, %s32, %s33
    %p37 = pneg %p31
    %p38 = scmp.eq.s32.totalorder %s8, 1
    %p39 = por %p37, %p38
    %p40 = scmp.ne.s32.totalorder %s32, %s35
    %p41 = scmp.eq.s32.totalorder %s8, 0
    %p42 = por %p40, %p41
    %p43 = scmp.ne.s32.totalorder %s32, %s35
    %p44 = scmp.eq.s32.totalorder %s13, 1
    %p45 = por %p43, %p44
    %p46 = scmp.ne.s32.totalorder %s35, %s36
    %p47 = scmp.eq.s32.totalorder %s13, 0
    %p48 = por %p46, %p47
    %p49 = scmp.ne.s32.totalorder %s35, %s36
    %p50 = scmp.eq.s32.totalorder %s14, 1
    %p51 = por %p49, %p50
    %p53 = scmp.ne.s32.totalorder %s36, %s52
    %p54 = scmp.eq.s32.totalorder %s14, 0
    %p55 = por %p53, %p54
    %s56 = sadd.s32 %s15, %s16
    %s57 = sadd.s32 %s27, %s23
    %s58 = ssub.s32 %s56, %s57
    %p59 = scmp.eq.s32.totalorder %s58, 0
    %s61 = sadd.s32 %s60, 1
    %s62 = scalar_select %p59, %s60, %s61
    %p65 = pneg %p59
    %p66 = scmp.eq.s32.totalorder %s8, 1
    %p67 = por %p65, %p66
    %p68 = scmp.ne.s32.totalorder %s60, %s63
    %p69 = scmp.eq.s32.totalorder %s8, 0
    %p70 = por %p68, %p69
    %p71 = scmp.ne.s32.totalorder %s60, %s63
    %p72 = scmp.eq.s32.totalorder %s13, 1
    %p73 = por %p71, %p72
    %p74 = scmp.ne.s32.totalorder %s63, %s64
    %p75 = scmp.eq.s32.totalorder %s13, 0
    %p76 = por %p74, %p75
    %p77 = scmp.ne.s32.totalorder %s63, %s64
    %p78 = scmp.eq.s32.totalorder %s14, 1
    %p79 = por %p77, %p78
    %p81 = scmp.ne.s32.totalorder %s64, %s80
    %p82 = scmp.eq.s32.totalorder %s14, 0
    %p83 = por %p81, %p82
    %s84 = ssub.s32 %s15, %s27
    %p85 = scmp.eq.s32.totalorder %s84, 0
    %s87 = sadd.s32 %s86, 1
    %s88 = scalar_select %p85, %s86, %s87
    %p91 = pneg %p85
    %p92 = scmp.eq.s32.totalorder %s8, 1
    %p93 = por %p91, %p92
    %p94 = scmp.ne.s32.totalorder %s86, %s89
    %p95 = scmp.eq.s32.totalorder %s8, 0
    %p96 = por %p94, %p95
    %p97 = scmp.ne.s32.totalorder %s86, %s89
    %p98 = scmp.eq.s32.totalorder %s13, 1
    %p99 = por %p97, %p98
    %p100 = scmp.ne.s32.totalorder %s89, %s90
    %p101 = scmp.eq.s32.totalorder %s13, 0
    %p102 = por %p100, %p101
    %p103 = scmp.ne.s32.totalorder %s89, %s90
    %p104 = scmp.eq.s32.totalorder %s14, 1
    %p105 = por %p103, %p104
    %p107 = scmp.ne.s32.totalorder %s90, %s106
    %p108 = scmp.eq.s32.totalorder %s14, 0
    %p109 = por %p107, %p108
    %p110 = scmp.le.s32.totalorder 1, %s8
    %p111 = scmp.lt.s32.totalorder %s8, 3
    %p112 = pnand %p110, %p111
    %p113 = pneg %p112
    // Predicated region
    $region9: #{_lambda_.3} parent=5 // pred_check
      _
    $region10: #{_lambda_.3} parent=5 // pred_check_branch
      %115 = sbr.rel (%p112) target = $region12
    $region11: #{_lambda_.3} parent=5 // pred_region
      %s116 = ssub.s32 %s8, 1
    $region12: #{_lambda_.3} parent=5 // pred_fallthru
      _
    %p117 = scmp.lt.s32.totalorder %s8, 2
    // Predicated region
    $region13: #{_lambda_.3} parent=5 // pred_check
      %p118 = pneg %p117
    $region14: #{_lambda_.3} parent=5 // pred_check_branch
      %120 = sbr.rel (%p118) target = $region16
    $region15: #{_lambda_.3} parent=5 // pred_region
      // Predicated region
      $region17: #{_lambda_.3} parent=15 // pred_check
        %p121 = pneg %p42
      $region18: #{_lambda_.3} parent=15 // pred_check_branch
        %123 = sbr.rel (%p121) target = $region20
      $region19: #{_lambda_.3} parent=15 // pred_region
        %s124 = sadd.s32 %s15, %s16
        %s125 = smul.u32 3, %s124
        %s126 = ssub.s32 5, %s125
        %p127 = scmp.lt.s32.totalorder %s126, 3
        %s128 = scalar_select %p127, %s126, 3
        %s129 = smul.u32 128, %s128
        %p130 = scmp.lt.s32.totalorder %s125, 4
        %s131 = scalar_select %p130, %s125, 4
        %s132 = smul.addr %s131, 8
        %s133 = scalar_lea.vmem %s0, %s132
        %s134 = sadd.s32 %s15, %s16
        %s135 = smul.u32 3, %s134
        %s136 = ssub.s32 5, %s135
        %p137 = scmp.lt.s32.totalorder %s136, 3
        %s138 = scalar_select %p137, %s136, 3
        %s139 = smul.u32 128, %s138
      $region20: #{_lambda_.3} parent=15 // pred_fallthru
        _
      // Predicated region
      $region21: #{_lambda_.3} parent=15 // pred_check
        %p140 = pneg %p70
      $region22: #{_lambda_.3} parent=15 // pred_check_branch
        %142 = sbr.rel (%p140) target = $region24
      $region23: #{_lambda_.3} parent=15 // pred_region
        %s143 = sadd.s32 %s15, %s16
        %s144 = smul.u32 3, %s143
        %s145 = ssub.s32 5, %s144
        %p146 = scmp.lt.s32.totalorder %s145, 3
        %s147 = scalar_select %p146, %s145, 3
        %s148 = smul.u32 128, %s147
        %p149 = scmp.lt.s32.totalorder %s144, 4
        %s150 = scalar_select %p149, %s144, 4
        %s151 = smul.addr %s150, 8
        %s152 = scalar_lea.vmem %s1, %s151
        %s153 = sadd.s32 %s15, %s16
        %s154 = smul.u32 3, %s153
        %s155 = ssub.s32 5, %s154
        %p156 = scmp.lt.s32.totalorder %s155, 3
        %s157 = scalar_select %p156, %s155, 3
        %s158 = smul.u32 128, %s157
      $region24: #{_lambda_.3} parent=15 // pred_fallthru
        _
    $region16: #{_lambda_.3} parent=5 // pred_fallthru
      _
    %p159 = scmp.le.s32.totalorder 1, %s8
    %p160 = scmp.lt.s32.totalorder %s8, 3
    %p161 = pnand %p159, %p160
    %p162 = pneg %p161
    // Predicated region
    $region25: #{_lambda_.3} parent=5 // pred_check
      _
    $region26: #{_lambda_.3} parent=5 // pred_check_branch
      %164 = sbr.rel (%p161) target = $region28
    $region27: #{_lambda_.3} parent=5 // pred_region
      %s165 = ssub.s32 %s8, 1
      %s166 = sadd.s32 %s17, %s18
      %s167 = smul.u32 3, %s166
      %s168 = ssub.s32 5, %s167
      %p169 = scmp.lt.s32.totalorder %s168, 3
      %s170 = scalar_select %p169, %s168, 3
      %s171 = smul.u32 128, %s170
      %p172 = scmp.lt.s32.totalorder %s167, 4
      %s173 = scalar_select %p172, %s167, 4
      %s174 = smul.addr %s173, 8
      %s175 = scalar_lea.vmem %s0, %s174
      %p176 = pneg %p48
      %p177 = pneg %p45
      %s178 = sadd.s32 %s17, %s18
      %s179 = smul.u32 3, %s178
      %s180 = ssub.s32 5, %s179
      %p181 = scmp.lt.s32.totalorder %s180, 3
      %s182 = scalar_select %p181, %s180, 3
      %s183 = smul.u32 128, %s182
      %p184 = scmp.lt.s32.totalorder %s179, 4
      %s185 = scalar_select %p184, %s179, 4
      %s186 = smul.addr %s185, 8
      %s187 = scalar_lea.vmem %s1, %s186
      %p188 = pneg %p76
      %p189 = pneg %p73
      %p190 = pneg %p102
      %p191 = pneg %p99
      %p192 = scmp.lt.s32.totalorder %s17, 1
      %s193 = scalar_select %p192, %s17, 1
      %s194 = smul.addr %s193, 8
      %s195 = scalar_lea.vmem %s2, %s194
      %s196 = sadd.s32 %s17, %s18
      %s197 = smul.u32 3, %s196
      %s198 = ssub.s32 5, %s197
      %p199 = scmp.lt.s32.totalorder %s198, 3
      %s200 = scalar_select %p199, %s198, 3
      %s201 = smul.u32 128, %s200
      %p202 = scmp.lt.s32.totalorder %s197, 4
      %s203 = scalar_select %p202, %s197, 4
      %s204 = smul.addr %s203, 8
      %s205 = scalar_lea.vmem %s0, %s204
      %s206 = sadd.s32 %s17, %s18
      %s207 = smul.u32 3, %s206
      %s208 = ssub.s32 5, %s207
      %p209 = scmp.lt.s32.totalorder %s208, 3
      %s210 = scalar_select %p209, %s208, 3
      %s211 = smul.u32 128, %s210
      %s212 = sadd.s32 %s17, %s18
      %s213 = smul.u32 3, %s212
      %s214 = ssub.s32 5, %s213
      %p215 = scmp.lt.s32.totalorder %s214, 3
      %s216 = scalar_select %p215, %s214, 3
      %s217 = smul.u32 128, %s216
      %p218 = scmp.lt.s32.totalorder %s213, 4
      %s219 = scalar_select %p218, %s213, 4
      %s220 = smul.addr %s219, 8
      %s221 = scalar_lea.vmem %s1, %s220
      %s222 = sadd.s32 %s17, %s18
      %s223 = smul.u32 3, %s222
      %s224 = ssub.s32 5, %s223
      %p225 = scmp.lt.s32.totalorder %s224, 3
      %s226 = scalar_select %p225, %s224, 3
      %s227 = smul.u32 128, %s226
      %p228 = scmp.lt.s32.totalorder %s17, 1
      %s229 = scalar_select %p228, %s17, 1
      %s230 = smul.addr %s229, 8
      %s231 = scalar_lea.vmem %s2, %s230
      %p232 = scmp.eq.s32.totalorder %s18, 0
      // Predicated region
      $region29: #{_lambda_.3} parent=27 // pred_check
        %p233 = pneg %p232
      $region30: #{_lambda_.3} parent=27 // pred_check_branch
        %235 = sbr.rel (%p233) target = $region32
      $region31: #{_lambda_.3} parent=27 // pred_region
        %236 = vst [vmem:[#allocation2] sm:$0xff] 0.0
      $region32: #{_lambda_.3} parent=27 // pred_fallthru
        _
      %p237 = scmp.eq.s32.totalorder %s17, 1
      %p238 = pnand %p237, %p232
      %p239 = pneg %p238
      // Predicated region
      $region33: #{_lambda_.3} parent=27 // pred_check
        _
      $region34: #{_lambda_.3} parent=27 // pred_check_branch
        %241 = sbr.rel (%p238) target = $region36
      $region35: #{_lambda_.3} parent=27 // pred_region
        %s242 = sadd.s32 %s17, %s18
        %s243 = smul.u32 %s242, 24
        %s244 = ssub.s32 36, %s243
        %v245 = vlaneseq
        %v246 = vshrl.u32 %v245, 7
        %v247 = vadd.s32 %v246, 8
        %v248 = vadd.s32 %v246, 16
        %v249 = vld [vmem:[%s205] sm:$0xff]
        %v250 = vld [vmem:[%s205 + $0x8] sm:$0xff]
        %v251 = vld [vmem:[%s205 + $0x10] sm:$0xff]
        %v252 = vld [vmem:[%s221] sm:$0xff]
        %v253 = vld [vmem:[%s221 + $0x8] sm:$0xff]
        %v254 = vld [vmem:[%s221 + $0x10] sm:$0xff]
        %v255 = vsub.f32 %v249, %v252
        %v256 = vsub.f32 %v250, %v253
        %v257 = vsub.f32 %v251, %v254
        %v258 = vstv %s244
        %vm259 = vcmp.lt.s32.totalorder %v246, %v258
        %vm260 = vcmp.lt.s32.totalorder %v247, %v258
        %vm261 = vcmp.lt.s32.totalorder %v248, %v258
        %v262 = vsel %vm259, %v255, 0.0
        %v263 = vsel %vm260, %v256, 0.0
        %v264 = vsel %vm261, %v257, 0.0
        %v265 = vmul.f32 %v262, %v262
        %v266 = vmul.f32 %v263, %v263
        %v267 = vmul.f32 %v264, %v264
        %v268 = vld [vmem:[#allocation2] sm:$0xff]
        %v269 = vadd.f32 %v265, %v266
        %v270 = vadd.f32 %v269, %v267
        %v271 = vadd.f32 %v268, %v270
        %272 = vst [vmem:[#allocation2] sm:$0xff] %v271
      $region36: #{_lambda_.3} parent=27 // pred_fallthru
        _
      // Predicated region
      $region37: #{_lambda_.3} parent=27 // pred_check
        %p273 = pneg %p238
      $region38: #{_lambda_.3} parent=27 // pred_check_branch
        %275 = sbr.rel (%p273) target = $region40
      $region39: #{_lambda_.3} parent=27 // pred_region
        %v276 = vld [vmem:[%s205] sm:$0xff]
        %v277 = vld [vmem:[%s205 + $0x8] sm:$0xff]
        %v278 = vld [vmem:[%s205 + $0x10] sm:$0xff]
        %v279 = vld [vmem:[%s221] sm:$0xff]
        %v280 = vld [vmem:[%s221 + $0x8] sm:$0xff]
        %v281 = vld [vmem:[%s221 + $0x10] sm:$0xff]
        %v282 = vsub.f32 %v276, %v279
        %v283 = vsub.f32 %v277, %v280
        %v284 = vsub.f32 %v278, %v281
        %v285 = vmul.f32 %v282, %v282
        %v286 = vmul.f32 %v283, %v283
        %v287 = vmul.f32 %v284, %v284
        %v288 = vld [vmem:[#allocation2] sm:$0xff]
        %v289 = vadd.f32 %v285, %v286
        %v290 = vadd.f32 %v289, %v287
        %v291 = vadd.f32 %v288, %v290
        %292 = vst [vmem:[#allocation2] sm:$0xff] %v291
      $region40: #{_lambda_.3} parent=27 // pred_fallthru
        _
      // Predicated region
      $region41: #{_lambda_.3} parent=27 // pred_check
        %p293 = pneg %p232
      $region42: #{_lambda_.3} parent=27 // pred_check_branch
        %295 = sbr.rel (%p293) target = $region44
      $region43: #{_lambda_.3} parent=27 // pred_region
        %v296 = vld [vmem:[#allocation2] sm:$0xff]
        %297 = vst [vmem:[%s231] sm:$0xff] %v296
      $region44: #{_lambda_.3} parent=27 // pred_fallthru
        _
      %p298 = scmp.lt.s32.totalorder %s17, 1
      %s299 = scalar_select %p298, %s17, 1
      %s300 = smul.addr %s299, 8
      %s301 = scalar_lea.vmem %s2, %s300
      // Predicated region
      $region45: #{_lambda_.3} parent=27 // pred_check
        %p302 = pneg %p99
      $region46: #{_lambda_.3} parent=27 // pred_check_branch
        %304 = sbr.rel (%p302) target = $region48
      $region47: #{_lambda_.3} parent=27 // pred_region
        _
      $region48: #{_lambda_.3} parent=27 // pred_fallthru
        _
    $region28: #{_lambda_.3} parent=5 // pred_fallthru
      _
    %p305 = scmp.le.s32.totalorder 2, %s8
    // Predicated region
    $region49: #{_lambda_.3} parent=5 // pred_check
      %p306 = pneg %p305
    $region50: #{_lambda_.3} parent=5 // pred_check_branch
      %308 = sbr.rel (%p306) target = $region52
    $region51: #{_lambda_.3} parent=5 // pred_region
      %s309 = ssub.s32 %s8, 2
      // Predicated region
      $region53: #{_lambda_.3} parent=51 // pred_check
        %p310 = pneg %p105
      $region54: #{_lambda_.3} parent=51 // pred_check_branch
        %312 = sbr.rel (%p310) target = $region56
      $region55: #{_lambda_.3} parent=51 // pred_region
        %p313 = scmp.lt.s32.totalorder %s19, 1
        %s314 = scalar_select %p313, %s19, 1
        %s315 = smul.addr %s314, 8
        %s316 = scalar_lea.vmem %s2, %s315
      $region56: #{_lambda_.3} parent=51 // pred_fallthru
        _
    $region52: #{_lambda_.3} parent=5 // pred_fallthru
      _
  $region6: #{_lambda_.3} parent=0 // loop_footer
    %s12 = sadd.s32 1, %s8
  $region7: #{_lambda_.3} parent=0 // loop_footer_branch
    %7 = sbr.rel target = $region3
  $region8: #{_lambda_.3} parent=0 // loop_exit
    _

</llo_original>
